<compile_context>
chip_gen: v7x
topology: tpu7x:2x2x1
jax: 0.10.0
libtpu: 0.0.40
codegen_flags: <defaults>
</compile_context>

<pallas_src>
import jax
import jax.numpy as jnp
from jax.experimental import pallas as pl
from jax.experimental.pallas import tpu as pltpu


# ----------------------------- Pallas kernel -----------------------------

def _ffn_kernel(x_ref, w1_ref, w2_ref, o_ref):
    # x_ref: (tm, d_model)   w1_ref: (d_model, d_ff)   w2_ref: (d_ff, d_model)
    h = jnp.dot(x_ref[...], w1_ref[...], preferred_element_type=jnp.float32)
    h = jnp.maximum(h, 0.0)                                   # ReLU (VPU)
    o_ref[...] = jnp.dot(h, w2_ref[...],
                         preferred_element_type=jnp.float32).astype(o_ref.dtype)


def position_wise_ffn(x, w1, w2, *, tm=128):
    """Fused position-wise FFN: relu(x @ w1) @ w2.

    x : [..., d_model] float32
    w1: [d_model, d_ff]   (transposed PyTorch layout so the kernel does x @ W)
    w2: [d_ff, d_model]
    """
    d_in, d_hidden = w1.shape
    d_out = w2.shape[1]

    lead_shape = x.shape[:-1]
    x2 = x.reshape(-1, d_in)
    m = x2.shape[0]

    # Pad the row dimension to a multiple of the row tile so the grid tiles
    # exactly (padding rows are discarded after the call).
    m_pad = pl.cdiv(m, tm) * tm
    if m_pad != m:
        x2 = jnp.pad(x2, ((0, m_pad - m), (0, 0)))

    out = pl.pallas_call(
        _ffn_kernel,
        out_shape=jax.ShapeDtypeStruct((m_pad, d_out), x.dtype),
        grid=(m_pad // tm,),
        in_specs=[
            pl.BlockSpec((tm, d_in), lambda i: (i, 0)),        # row tile of x
            pl.BlockSpec((d_in, d_hidden), lambda i: (0, 0)),  # W1, VMEM-resident
            pl.BlockSpec((d_hidden, d_out), lambda i: (0, 0)), # W2, VMEM-resident
        ],
        out_specs=pl.BlockSpec((tm, d_out), lambda i: (i, 0)),
        compiler_params=pltpu.CompilerParams(
            dimension_semantics=("parallel",)),
    )(x2, w1, w2)

    if m_pad != m:
        out = out[:m]
    return out.reshape(*lead_shape, d_out)


# ----------------------- module-like Python wrapper -----------------------

class PositionWiseFeedForwardNet:
    """JAX/Pallas port of the PyTorch module (bias-free Linear->ReLU->Linear)."""

    def __init__(self, key, d_model, d_ff):
        k1, k2 = jax.random.split(key)
        # nn.Linear(in, out, bias=False) default init: U(-1/sqrt(in), 1/sqrt(in)).
        # Stored here as [in, out] so the kernel computes x @ W directly.
        b1 = 1.0 / (d_model ** 0.5)
        b2 = 1.0 / (d_ff ** 0.5)
        self.w1 = jax.random.uniform(k1, (d_model, d_ff), jnp.float32, -b1, b1)
        self.w2 = jax.random.uniform(k2, (d_ff, d_model), jnp.float32, -b2, b2)

    def __call__(self, x):
        return position_wise_ffn(x, self.w1, self.w2)


# --------------------------------- main -----------------------------------

if __name__ == "__main__":
    # Small but TPU-friendly (lane-dense) shapes.
    d_model, d_ff = 128, 512
    batch, seq = 2, 64          # batch*seq = 128 rows -> one (128, d) MXU tile

    root = jax.random.PRNGKey(0)
    k_param, k_x = jax.random.split(root)

    ffn = PositionWiseFeedForwardNet(k_param, d_model, d_ff)
    x = jax.random.normal(k_x, (batch, seq, d_model), jnp.float32)

    out = ffn(x)
    jax.block_until_ready(out)

    # Pure-JAX reference (high precision) for a correctness check.
    x2 = x.reshape(-1, d_model)
    h_ref = jnp.maximum(
        jax.lax.dot_general(x2, ffn.w1, (((1,), (0,)), ((), ())),
                            precision=jax.lax.Precision.HIGHEST), 0.0)
    ref = jax.lax.dot_general(h_ref, ffn.w2, (((1,), (0,)), ((), ())),
                              precision=jax.lax.Precision.HIGHEST)
    ref = ref.reshape(batch, seq, d_model)

    assert out.shape == (batch, seq, d_model)
    assert bool(jnp.all(jnp.isfinite(out)))
    assert bool(jnp.allclose(out, ref, atol=1e-2, rtol=1e-2))

    print("KERNEL_OK")
</pallas_src>

<mosaic_0001>
module attributes {stable_mosaic.version = 11 : i64} {
  func.func @_ffn_kernel(%arg0: i32, %arg1: memref<128x128xf32, #tpu.memory_space<vmem>>, %arg2: memref<128x512xf32, #tpu.memory_space<vmem>>, %arg3: memref<512x128xf32, #tpu.memory_space<vmem>>, %arg4: memref<128x128xf32, #tpu.memory_space<vmem>>) attributes {dimension_semantics = [#tpu.dimension_semantics<parallel>], iteration_bounds = array<i64: 1>, scalar_prefetch = 0 : i64, scratch_operands = 0 : i64, tpu.core_type = #tpu.core_type<tc>, window_params = [{transform_indices = @transform_0, window_bounds = array<i64: 128, 128>}, {pipeline_mode = #tpu.pipeline_mode<synchronous>, transform_indices = @transform_1, window_bounds = array<i64: 128, 512>}, {pipeline_mode = #tpu.pipeline_mode<synchronous>, transform_indices = @transform_2, window_bounds = array<i64: 512, 128>}, {transform_indices = @transform_3, window_bounds = array<i64: 128, 128>}]} {
    %c0 = arith.constant 0 : index
    %c0_0 = arith.constant 0 : index
    %0 = vector.load %arg1[%c0, %c0_0] : memref<128x128xf32, #tpu.memory_space<vmem>>, vector<128x128xf32>
    %c0_1 = arith.constant 0 : index
    %c0_2 = arith.constant 0 : index
    %1 = vector.load %arg2[%c0_1, %c0_2] : memref<128x512xf32, #tpu.memory_space<vmem>>, vector<128x512xf32>
    %cst = arith.constant dense<0.000000e+00> : vector<128x512xf32>
    %2 = tpu.matmul %0, %1, %cst {dimension_numbers = #tpu.dot_dimension_numbers<[1], [0], [0], [1], [0, 0, 1, 1], [], []>} : vector<128x128xf32>, vector<128x512xf32>, vector<128x512xf32> -> vector<128x512xf32>
    %cst_3 = arith.constant 0.000000e+00 : f32
    %3 = vector.broadcast %cst_3 : f32 to vector<128x512xf32>
    %4 = arith.maximumf %2, %3 : vector<128x512xf32>
    %c0_4 = arith.constant 0 : index
    %c0_5 = arith.constant 0 : index
    %5 = vector.load %arg3[%c0_4, %c0_5] : memref<512x128xf32, #tpu.memory_space<vmem>>, vector<512x128xf32>
    %cst_6 = arith.constant dense<0.000000e+00> : vector<128x128xf32>
    %6 = tpu.matmul %4, %5, %cst_6 {dimension_numbers = #tpu.dot_dimension_numbers<[1], [0], [0], [1], [0, 0, 1, 1], [], []>} : vector<128x512xf32>, vector<512x128xf32>, vector<128x128xf32> -> vector<128x128xf32>
    %c0_7 = arith.constant 0 : index
    %c0_8 = arith.constant 0 : index
    %7 = vector.load %arg4[%c0_7, %c0_8] : memref<128x128xf32, #tpu.memory_space<vmem>>, vector<128x128xf32>
    tpu.vector_store %arg4[%c0_7, %c0_8], %6 {strides = array<i32>} : memref<128x128xf32, #tpu.memory_space<vmem>>, vector<128x128xf32>,
    return
  }
  func.func @transform_0(%arg0: i32) -> (i32, i32) {
    %c0_i32 = arith.constant 0 : i32
    %c0_i32_0 = arith.constant 0 : i32
    return %arg0, %c0_i32 : i32, i32
  }
  func.func @transform_1(%arg0: i32) -> (i32, i32) {
    %c0_i32 = arith.constant 0 : i32
    %c0_i32_0 = arith.constant 0 : i32
    %c0_i32_1 = arith.constant 0 : i32
    return %c0_i32, %c0_i32_0 : i32, i32
  }
  func.func @transform_2(%arg0: i32) -> (i32, i32) {
    %c0_i32 = arith.constant 0 : i32
    %c0_i32_0 = arith.constant 0 : i32
    %c0_i32_1 = arith.constant 0 : i32
    return %c0_i32, %c0_i32_0 : i32, i32
  }
  func.func @transform_3(%arg0: i32) -> (i32, i32) {
    %c0_i32 = arith.constant 0 : i32
    %c0_i32_0 = arith.constant 0 : i32
    return %arg0, %c0_i32 : i32, i32
  }
}

</mosaic_0001>

<llo_original>
// kernel: tpu_custom_call.1
$region0: #{tpu_custom_call.1}
  #allocation0 [shape = 'u32[]', space=smem, size = 0x4, offset = 0x4, fixed_abs, tag = 'smem constant byte address 0x4 - core index']
  #allocation1 [shape = 'u32[144,128]{1,0:T(1,128)}', space=vmem, size = 0x12000, scoped, tag = 'internal scratch']
  %s0 = inlined_call_operand.hbm [shape: f32[128,128], index: 0, kind: input, shape index: {}]
  %s1 = inlined_call_operand.hbm [shape: f32[128,512], index: 1, kind: input, shape index: {}]
  %s2 = inlined_call_operand.hbm [shape: f32[512,128], index: 2, kind: input, shape index: {}]
  %s3 = inlined_call_operand.hbm [shape: f32[128,128], index: 3, kind: output, shape index: {}]
  %s4 = sld [smem:[#allocation0]]
  $region34: #{tpu_custom_call.1} parent=0
    _
  %s6 = ssub.s32 1, %s4
  %s7 = scalar_select 0, %s6, %s4
  $region1: #{tpu_custom_call.1} parent=0
    #allocation2 [shape = 'u8[65536]{0}', space=vmem, size = 0x10000, scoped, tag = 'input window, operand 0, single buffered']
    #allocation3 [shape = 's32[1]{0}', space=sflag, size = 0x4, scoped, tag = 'scoped memory for tpu_custom_call.1']
    #allocation4 [shape = 's32[1]{0}', space=sflag, size = 0x4, scoped, tag = 'scoped memory for tpu_custom_call.1']
    #allocation5 [shape = 'u8[262144]{0}', space=vmem, size = 0x40000, scoped, tag = 'input window, operand 1, single buffered']
    #allocation6 [shape = 's32[1]{0}', space=sflag, size = 0x4, scoped, tag = 'scoped memory for tpu_custom_call.1']
    #allocation7 [shape = 'u8[262144]{0}', space=vmem, size = 0x40000, scoped, tag = 'input window, operand 2, single buffered']
    #allocation8 [shape = 'u8[65536]{0}', space=vmem, size = 0x10000, scoped, tag = 'output window, operand 0, single buffered']
    %8 = vsyncpa [#allocation3], 0
    %9 = vsyncpa [#allocation6], 0
    %10 = vsyncpa [#allocation4], 0
    // Predicated region
    $region2: #{tpu_custom_call.1} parent=1 // pred_check
      _
    $region3: #{tpu_custom_call.1} parent=1 // pred_check_branch
      %12 = sbr.rel (0) target = $region5
    $region4: #{tpu_custom_call.1} parent=1 // pred_region
      %s14 = ssub.s32 2048, 2048
      %15 = vsyncadd [#allocation3], %s14
      %s16 = sshll.u32 [#allocation2], 4
      %s17 = int_to_ptr.vmem [resolvable:$true] %s16
      %22 = dma.hbm_to_vmem [thread:$0]  %s0, 2048, %s17, [#allocation3], 128, 128, 8
    $region5: #{tpu_custom_call.1} parent=1 // pred_fallthru
      _
    // Predicated region
    $region6: #{tpu_custom_call.1} parent=1 // pred_check
      _
    $region7: #{tpu_custom_call.1} parent=1 // pred_check_branch
      %24 = sbr.rel (0) target = $region9
    $region8: #{tpu_custom_call.1} parent=1 // pred_region
      %s26 = ssub.s32 8192, 8192
      %27 = vsyncadd [#allocation6], %s26
      %s28 = sshll.u32 [#allocation5], 4
      %s29 = int_to_ptr.vmem [resolvable:$true] %s28
      %34 = dma.hbm_to_vmem [thread:$0]  %s1, 8192, %s29, [#allocation6], 512, 512, 32
    $region9: #{tpu_custom_call.1} parent=1 // pred_fallthru
      _
    // Predicated region
    $region10: #{tpu_custom_call.1} parent=1 // pred_check
      _
    $region11: #{tpu_custom_call.1} parent=1 // pred_check_branch
      %36 = sbr.rel (0) target = $region13
    $region12: #{tpu_custom_call.1} parent=1 // pred_region
      %s38 = ssub.s32 8192, 8192
      %39 = vsyncadd [#allocation6], %s38
      %s40 = sshll.u32 [#allocation7], 4
      %s41 = int_to_ptr.vmem [resolvable:$true] %s40
      %46 = dma.hbm_to_vmem [thread:$0]  %s2, 8192, %s41, [#allocation6], 128, 128, 8
    $region13: #{tpu_custom_call.1} parent=1 // pred_fallthru
      _
    // Predicated region
    $region14: #{tpu_custom_call.1} parent=1 // pred_check
      _
    $region15: #{tpu_custom_call.1} parent=1 // pred_check_branch
      %48 = sbr.rel (0) target = $region17
    $region16: #{tpu_custom_call.1} parent=1 // pred_region
      %49 = dma.done [#allocation3], 2048
    $region17: #{tpu_custom_call.1} parent=1 // pred_fallthru
      _
    // Predicated region
    $region18: #{tpu_custom_call.1} parent=1 // pred_check
      _
    $region19: #{tpu_custom_call.1} parent=1 // pred_check_branch
      %51 = sbr.rel (0) target = $region21
    $region20: #{tpu_custom_call.1} parent=1 // pred_region
      %52 = dma.done [#allocation6], 8192
    $region21: #{tpu_custom_call.1} parent=1 // pred_fallthru
      _
    // Predicated region
    $region22: #{tpu_custom_call.1} parent=1 // pred_check
      _
    $region23: #{tpu_custom_call.1} parent=1 // pred_check_branch
      %54 = sbr.rel (0) target = $region25
    $region24: #{tpu_custom_call.1} parent=1 // pred_region
      %55 = dma.done [#allocation6], 8192
    $region25: #{tpu_custom_call.1} parent=1 // pred_fallthru
      _
    %v56 = vld [vmem:[#allocation2] sm:$0xff]
    %v57 = vld [vmem:[#allocation2 + $0x8] sm:$0xff]
    %v58 = vld [vmem:[#allocation2 + $0x10] sm:$0xff]
    %v59 = vld [vmem:[#allocation2 + $0x18] sm:$0xff]
    %v60 = vld [vmem:[#allocation2 + $0x20] sm:$0xff]
    %v61 = vld [vmem:[#allocation2 + $0x28] sm:$0xff]
    %v62 = vld [vmem:[#allocation2 + $0x30] sm:$0xff]
    %v63 = vld [vmem:[#allocation2 + $0x38] sm:$0xff]
    %v64 = vld [vmem:[#allocation2 + $0x40] sm:$0xff]
    %v65 = vld [vmem:[#allocation2 + $0x48] sm:$0xff]
    %v66 = vld [vmem:[#allocation2 + $0x50] sm:$0xff]
    %v67 = vld [vmem:[#allocation2 + $0x58] sm:$0xff]
    %v68 = vld [vmem:[#allocation2 + $0x60] sm:$0xff]
    %v69 = vld [vmem:[#allocation2 + $0x68] sm:$0xff]
    %v70 = vld [vmem:[#allocation2 + $0x70] sm:$0xff]
    %v71 = vld [vmem:[#allocation2 + $0x78] sm:$0xff]
    %v72 = vld [vmem:[#allocation5] sm:$0xff]
    %v73 = vld [vmem:[#allocation5 + $0x8] sm:$0xff]
    %v74 = vld [vmem:[#allocation5 + $0x10] sm:$0xff]
    %v75 = vld [vmem:[#allocation5 + $0x18] sm:$0xff]
    %v76 = vld [vmem:[#allocation5 + $0x20] sm:$0xff]
    %v77 = vld [vmem:[#allocation5 + $0x28] sm:$0xff]
    %v78 = vld [vmem:[#allocation5 + $0x30] sm:$0xff]
    %v79 = vld [vmem:[#allocation5 + $0x38] sm:$0xff]
    %v80 = vld [vmem:[#allocation5 + $0x40] sm:$0xff]
    %v81 = vld [vmem:[#allocation5 + $0x48] sm:$0xff]
    %v82 = vld [vmem:[#allocation5 + $0x50] sm:$0xff]
    %v83 = vld [vmem:[#allocation5 + $0x58] sm:$0xff]
    %v84 = vld [vmem:[#allocation5 + $0x60] sm:$0xff]
    %v85 = vld [vmem:[#allocation5 + $0x68] sm:$0xff]
    %v86 = vld [vmem:[#allocation5 + $0x70] sm:$0xff]
    %v87 = vld [vmem:[#allocation5 + $0x78] sm:$0xff]
    %v88 = vld [vmem:[#allocation5 + $0x80] sm:$0xff]
    %v89 = vld [vmem:[#allocation5 + $0x88] sm:$0xff]
    %v90 = vld [vmem:[#allocation5 + $0x90] sm:$0xff]
    %v91 = vld [vmem:[#allocation5 + $0x98] sm:$0xff]
    %v92 = vld [vmem:[#allocation5 + $0xa0] sm:$0xff]
    %v93 = vld [vmem:[#allocation5 + $0xa8] sm:$0xff]
    %v94 = vld [vmem:[#allocation5 + $0xb0] sm:$0xff]
    %v95 = vld [vmem:[#allocation5 + $0xb8] sm:$0xff]
    %v96 = vld [vmem:[#allocation5 + $0xc0] sm:$0xff]
    %v97 = vld [vmem:[#allocation5 + $0xc8] sm:$0xff]
    %v98 = vld [vmem:[#allocation5 + $0xd0] sm:$0xff]
    %v99 = vld [vmem:[#allocation5 + $0xd8] sm:$0xff]
    %v100 = vld [vmem:[#allocation5 + $0xe0] sm:$0xff]
    %v101 = vld [vmem:[#allocation5 + $0xe8] sm:$0xff]
    %v102 = vld [vmem:[#allocation5 + $0xf0] sm:$0xff]
    %v103 = vld [vmem:[#allocation5 + $0xf8] sm:$0xff]
    %v104 = vld [vmem:[#allocation5 + $0x100] sm:$0xff]
    %v105 = vld [vmem:[#allocation5 + $0x108] sm:$0xff]
    %v106 = vld [vmem:[#allocation5 + $0x110] sm:$0xff]
    %v107 = vld [vmem:[#allocation5 + $0x118] sm:$0xff]
    %v108 = vld [vmem:[#allocation5 + $0x120] sm:$0xff]
    %v109 = vld [vmem:[#allocation5 + $0x128] sm:$0xff]
    %v110 = vld [vmem:[#allocation5 + $0x130] sm:$0xff]
    %v111 = vld [vmem:[#allocation5 + $0x138] sm:$0xff]
    %v112 = vld [vmem:[#allocation5 + $0x140] sm:$0xff]
    %v113 = vld [vmem:[#allocation5 + $0x148] sm:$0xff]
    %v114 = vld [vmem:[#allocation5 + $0x150] sm:$0xff]
    %v115 = vld [vmem:[#allocation5 + $0x158] sm:$0xff]
    %v116 = vld [vmem:[#allocation5 + $0x160] sm:$0xff]
    %v117 = vld [vmem:[#allocation5 + $0x168] sm:$0xff]
    %v118 = vld [vmem:[#allocation5 + $0x170] sm:$0xff]
    %v119 = vld [vmem:[#allocation5 + $0x178] sm:$0xff]
    %v120 = vld [vmem:[#allocation5 + $0x180] sm:$0xff]
    %v121 = vld [vmem:[#allocation5 + $0x188] sm:$0xff]
    %v122 = vld [vmem:[#allocation5 + $0x190] sm:$0xff]
    %v123 = vld [vmem:[#allocation5 + $0x198] sm:$0xff]
    %v124 = vld [vmem:[#allocation5 + $0x1a0] sm:$0xff]
    %v125 = vld [vmem:[#allocation5 + $0x1a8] sm:$0xff]
    %v126 = vld [vmem:[#allocation5 + $0x1b0] sm:$0xff]
    %v127 = vld [vmem:[#allocation5 + $0x1b8] sm:$0xff]
    %v128 = vld [vmem:[#allocation5 + $0x1c0] sm:$0xff]
    %v129 = vld [vmem:[#allocation5 + $0x1c8] sm:$0xff]
    %v130 = vld [vmem:[#allocation5 + $0x1d0] sm:$0xff]
    %v131 = vld [vmem:[#allocation5 + $0x1d8] sm:$0xff]
    %v132 = vld [vmem:[#allocation5 + $0x1e0] sm:$0xff]
    %v133 = vld [vmem:[#allocation5 + $0x1e8] sm:$0xff]
    %v134 = vld [vmem:[#allocation5 + $0x1f0] sm:$0xff]
    %v135 = vld [vmem:[#allocation5 + $0x1f8] sm:$0xff]
    %136 = vmatprep.subr.mxu0 %v73
    %137 = vmatpush1.msra.mxu0 %v72
    %138 = vmatprep.subr.mxu0 %v77
    %139 = vmatpush1.msra.mxu0 %v76
    %140 = vmatprep.subr.mxu0 %v81
    %141 = vmatpush1.msra.mxu0 %v80
    %142 = vmatprep.subr.mxu0 %v85
    %143 = vmatpush1.msra.mxu0 %v84
    %144 = vmatprep.subr.mxu0 %v89
    %145 = vmatpush1.msra.mxu0 %v88
    %146 = vmatprep.subr.mxu0 %v93
    %147 = vmatpush1.msra.mxu0 %v92
    %148 = vmatprep.subr.mxu0 %v97
    %149 = vmatpush1.msra.mxu0 %v96
    %150 = vmatprep.subr.mxu0 %v101
    %151 = vmatpush1.msra.mxu0 %v100
    %152 = vmatprep.subr.mxu0 %v105
    %153 = vmatpush1.msra.mxu0 %v104
    %154 = vmatprep.subr.mxu0 %v109
    %155 = vmatpush1.msra.mxu0 %v108
    %156 = vmatprep.subr.mxu0 %v113
    %157 = vmatpush1.msra.mxu0 %v112
    %158 = vmatprep.subr.mxu0 %v117
    %159 = vmatpush1.msra.mxu0 %v116
    %160 = vmatprep.subr.mxu0 %v121
    %161 = vmatpush1.msra.mxu0 %v120
    %162 = vmatprep.subr.mxu0 %v125
    %163 = vmatpush1.msra.mxu0 %v124
    %164 = vmatprep.subr.mxu0 %v129
    %165 = vmatpush1.msra.mxu0 %v128
    %166 = vmatprep.subr.mxu0 %v133
    %167 = vmatpush1.msra.mxu0 %v132
    %168 = vmatprep.subr.mxu0 0.0
    %169 = vmatpush1.msra.mxu0 0.0
    %170 = vmatprep.subr.mxu0 0.0
    %171 = vmatpush1.msra.mxu0 0.0
    %172 = vmatprep.subr.mxu0 0.0
    %173 = vmatpush1.msra.mxu0 0.0
    %174 = vmatprep.subr.mxu0 0.0
    %175 = vmatpush1.msra.mxu0 0.0
    %176 = vmatprep.subr.mxu0 0.0
    %177 = vmatpush1.msra.mxu0 0.0
    %178 = vmatprep.subr.mxu0 0.0
    %179 = vmatpush1.msra.mxu0 0.0
    %180 = vmatprep.subr.mxu0 0.0
    %181 = vmatpush1.msra.mxu0 0.0
    %182 = vmatprep.subr.mxu0 0.0
    %183 = vmatpush1.msra.mxu0 0.0
    %184 = vmatprep.subr.mxu0 0.0
    %185 = vmatpush1.msra.mxu0 0.0
    %186 = vmatprep.subr.mxu0 0.0
    %187 = vmatpush1.msra.mxu0 0.0
    %188 = vmatprep.subr.mxu0 0.0
    %189 = vmatpush1.msra.mxu0 0.0
    %190 = vmatprep.subr.mxu0 0.0
    %191 = vmatpush1.msra.mxu0 0.0
    %192 = vmatprep.subr.mxu0 0.0
    %193 = vmatpush1.msra.mxu0 0.0
    %194 = vmatprep.subr.mxu0 0.0
    %195 = vmatpush1.msra.mxu0 0.0
    %196 = vmatprep.subr.mxu0 0.0
    %197 = vmatpush1.msra.mxu0 0.0
    %198 = vmatprep.subr.mxu0 0.0
    %199 = vmatpush1.msra.mxu0 0.0
    %200 = vmatprep.mubr.f32.mxu0 0.0
    %201 = vmatmul.mubr.f32.gmra.mrb[0].mxu0 %v56
    %v202 = vpop.f32.mrb[0].mxu0
    %v203 = vadd.f32 0.0, %v202
    %v204 = vpop.f32.mrb[0].mxu0
    %v205 = vadd.f32 0.0, %v204
    %206 = vmatprep.mubr.f32.mxu0 0.0
    %207 = vmatmul.mubr.f32.gmra.mrb[0].mxu0 %v57
    %v208 = vpop.f32.mrb[0].mxu0
    %v209 = vadd.f32 0.0, %v208
    %v210 = vpop.f32.mrb[0].mxu0
    %v211 = vadd.f32 0.0, %v210
    %212 = vmatprep.mubr.f32.mxu0 0.0
    %213 = vmatmul.mubr.f32.gmra.mrb[0].mxu0 %v58
    %v214 = vpop.f32.mrb[0].mxu0
    %v215 = vadd.f32 0.0, %v214
    %v216 = vpop.f32.mrb[0].mxu0
    %v217 = vadd.f32 0.0, %v216
    %218 = vmatprep.mubr.f32.mxu0 0.0
    %219 = vmatmul.mubr.f32.gmra.mrb[0].mxu0 %v59
    %v220 = vpop.f32.mrb[0].mxu0
    %v221 = vadd.f32 0.0, %v220
    %v222 = vpop.f32.mrb[0].mxu0
    %v223 = vadd.f32 0.0, %v222
    %224 = vmatprep.mubr.f32.mxu0 0.0
    %225 = vmatmul.mubr.f32.gmra.mrb[0].mxu0 %v60
    %v226 = vpop.f32.mrb[0].mxu0
    %v227 = vadd.f32 0.0, %v226
    %v228 = vpop.f32.mrb[0].mxu0
    %v229 = vadd.f32 0.0, %v228
    %230 = vmatprep.mubr.f32.mxu0 0.0
    %231 = vmatmul.mubr.f32.gmra.mrb[0].mxu0 %v61
    %v232 = vpop.f32.mrb[0].mxu0
    %v233 = vadd.f32 0.0, %v232
    %v234 = vpop.f32.mrb[0].mxu0
    %v235 = vadd.f32 0.0, %v234
    %236 = vmatprep.mubr.f32.mxu0 0.0
    %237 = vmatmul.mubr.f32.gmra.mrb[0].mxu0 %v62
    %v238 = vpop.f32.mrb[0].mxu0
    %v239 = vadd.f32 0.0, %v238
    %v240 = vpop.f32.mrb[0].mxu0
    %v241 = vadd.f32 0.0, %v240
    %242 = vmatprep.mubr.f32.mxu0 0.0
    %243 = vmatmul.mubr.f32.gmra.mrb[0].mxu0 %v63
    %v244 = vpop.f32.mrb[0].mxu0
    %v245 = vadd.f32 0.0, %v244
    %v246 = vpop.f32.mrb[0].mxu0
    %v247 = vadd.f32 0.0, %v246
    %248 = vmatprep.mubr.f32.mxu0 0.0
    %249 = vmatmul.mubr.f32.gmra.mrb[0].mxu0 %v64
    %v250 = vpop.f32.mrb[0].mxu0
    %v251 = vadd.f32 0.0, %v250
    %v252 = vpop.f32.mrb[0].mxu0
    %v253 = vadd.f32 0.0, %v252
    %254 = vmatprep.mubr.f32.mxu0 0.0
    %255 = vmatmul.mubr.f32.gmra.mrb[0].mxu0 %v65
    %v256 = vpop.f32.mrb[0].mxu0
    %v257 = vadd.f32 0.0, %v256
    %v258 = vpop.f32.mrb[0].mxu0
    %v259 = vadd.f32 0.0, %v258
    %260 = vmatprep.mubr.f32.mxu0 0.0
    %261 = vmatmul.mubr.f32.gmra.mrb[0].mxu0 %v66
    %v262 = vpop.f32.mrb[0].mxu0
    %v263 = vadd.f32 0.0, %v262
    %v264 = vpop.f32.mrb[0].mxu0
    %v265 = vadd.f32 0.0, %v264
    %266 = vmatprep.mubr.f32.mxu0 0.0
    %267 = vmatmul.mubr.f32.gmra.mrb[0].mxu0 %v67
    %v268 = vpop.f32.mrb[0].mxu0
    %v269 = vadd.f32 0.0, %v268
    %v270 = vpop.f32.mrb[0].mxu0
    %v271 = vadd.f32 0.0, %v270
    %272 = vmatprep.mubr.f32.mxu0 0.0
    %273 = vmatmul.mubr.f32.gmra.mrb[0].mxu0 %v68
    %v274 = vpop.f32.mrb[0].mxu0
    %v275 = vadd.f32 0.0, %v274
    %v276 = vpop.f32.mrb[0].mxu0
    %v277 = vadd.f32 0.0, %v276
    %278 = vmatprep.mubr.f32.mxu0 0.0
    %279 = vmatmul.mubr.f32.gmra.mrb[0].mxu0 %v69
    %v280 = vpop.f32.mrb[0].mxu0
    %v281 = vadd.f32 0.0, %v280
    %v282 = vpop.f32.mrb[0].mxu0
    %v283 = vadd.f32 0.0, %v282
    %284 = vmatprep.mubr.f32.mxu0 0.0
    %285 = vmatmul.mubr.f32.gmra.mrb[0].mxu0 %v70
    %v286 = vpop.f32.mrb[0].mxu0
    %v287 = vadd.f32 0.0, %v286
    %v288 = vpop.f32.mrb[0].mxu0
    %v289 = vadd.f32 0.0, %v288
    %290 = vmatprep.mubr.f32.mxu0 0.0
    %291 = vmatmul.mubr.f32.gmra.mrb[0].mxu0 %v71
    %v292 = vpop.f32.mrb[0].mxu0
    %v293 = vadd.f32 0.0, %v292
    %v294 = vpop.f32.mrb[0].mxu0
    %v295 = vadd.f32 0.0, %v294
    %296 = vdwg.mxu0
    %297 = vmatprep.subr.mxu0 %v75
    %298 = vmatpush1.msra.mxu0 %v74
    %299 = vmatprep.subr.mxu0 %v79
    %300 = vmatpush1.msra.mxu0 %v78
    %301 = vmatprep.subr.mxu0 %v83
    %302 = vmatpush1.msra.mxu0 %v82
    %303 = vmatprep.subr.mxu0 %v87
    %304 = vmatpush1.msra.mxu0 %v86
    %305 = vmatprep.subr.mxu0 %v91
    %306 = vmatpush1.msra.mxu0 %v90
    %307 = vmatprep.subr.mxu0 %v95
    %308 = vmatpush1.msra.mxu0 %v94
    %309 = vmatprep.subr.mxu0 %v99
    %310 = vmatpush1.msra.mxu0 %v98
    %311 = vmatprep.subr.mxu0 %v103
    %312 = vmatpush1.msra.mxu0 %v102
    %313 = vmatprep.subr.mxu0 %v107
    %314 = vmatpush1.msra.mxu0 %v106
    %315 = vmatprep.subr.mxu0 %v111
    %316 = vmatpush1.msra.mxu0 %v110
    %317 = vmatprep.subr.mxu0 %v115
    %318 = vmatpush1.msra.mxu0 %v114
    %319 = vmatprep.subr.mxu0 %v119
    %320 = vmatpush1.msra.mxu0 %v118
    %321 = vmatprep.subr.mxu0 %v123
    %322 = vmatpush1.msra.mxu0 %v122
    %323 = vmatprep.subr.mxu0 %v127
    %324 = vmatpush1.msra.mxu0 %v126
    %325 = vmatprep.subr.mxu0 %v131
    %326 = vmatpush1.msra.mxu0 %v130
    %327 = vmatprep.subr.mxu0 %v135
    %328 = vmatpush1.msra.mxu0 %v134
    %329 = vmatprep.subr.mxu0 0.0
    %330 = vmatpush1.msra.mxu0 0.0
    %331 = vmatprep.subr.mxu0 0.0
    %332 = vmatpush1.msra.mxu0 0.0
    %333 = vmatprep.subr.mxu0 0.0
    %334 = vmatpush1.msra.mxu0 0.0
    %335 = vmatprep.subr.mxu0 0.0
    %336 = vmatpush1.msra.mxu0 0.0
    %337 = vmatprep.subr.mxu0 0.0
    %338 = vmatpush1.msra.mxu0 0.0
    %339 = vmatprep.subr.mxu0 0.0
    %340 = vmatpush1.msra.mxu0 0.0
    %341 = vmatprep.subr.mxu0 0.0
    %342 = vmatpush1.msra.mxu0 0.0
    %343 = vmatprep.subr.mxu0 0.0
    %344 = vmatpush1.msra.mxu0 0.0
    %345 = vmatprep.subr.mxu0 0.0
    %346 = vmatpush1.msra.mxu0 0.0
    %347 = vmatprep.subr.mxu0 0.0
    %348 = vmatpush1.msra.mxu0 0.0
    %349 = vmatprep.subr.mxu0 0.0
    %350 = vmatpush1.msra.mxu0 0.0
    %351 = vmatprep.subr.mxu0 0.0
    %352 = vmatpush1.msra.mxu0 0.0
    %353 = vmatprep.subr.mxu0 0.0
    %354 = vmatpush1.msra.mxu0 0.0
    %355 = vmatprep.subr.mxu0 0.0
    %356 = vmatpush1.msra.mxu0 0.0
    %357 = vmatprep.subr.mxu0 0.0
    %358 = vmatpush1.msra.mxu0 0.0
    %359 = vmatprep.subr.mxu0 0.0
    %360 = vmatpush1.msra.mxu0 0.0
    %361 = vmatprep.mubr.f32.mxu0 0.0
    %362 = vmatmul.mubr.f32.gmra.mrb[0].mxu0 %v56
    %v363 = vpop.f32.mrb[0].mxu0
    %v364 = vadd.f32 0.0, %v363
    %v365 = vpop.f32.mrb[0].mxu0
    %v366 = vadd.f32 0.0, %v365
    %367 = vmatprep.mubr.f32.mxu0 0.0
    %368 = vmatmul.mubr.f32.gmra.mrb[0].mxu0 %v57
    %v369 = vpop.f32.mrb[0].mxu0
    %v370 = vadd.f32 0.0, %v369
    %v371 = vpop.f32.mrb[0].mxu0
    %v372 = vadd.f32 0.0, %v371
    %373 = vmatprep.mubr.f32.mxu0 0.0
    %374 = vmatmul.mubr.f32.gmra.mrb[0].mxu0 %v58
    %v375 = vpop.f32.mrb[0].mxu0
    %v376 = vadd.f32 0.0, %v375
    %v377 = vpop.f32.mrb[0].mxu0
    %v378 = vadd.f32 0.0, %v377
    %379 = vmatprep.mubr.f32.mxu0 0.0
    %380 = vmatmul.mubr.f32.gmra.mrb[0].mxu0 %v59
    %v381 = vpop.f32.mrb[0].mxu0
    %v382 = vadd.f32 0.0, %v381
    %v383 = vpop.f32.mrb[0].mxu0
    %v384 = vadd.f32 0.0, %v383
    %385 = vmatprep.mubr.f32.mxu0 0.0
    %386 = vmatmul.mubr.f32.gmra.mrb[0].mxu0 %v60
    %v387 = vpop.f32.mrb[0].mxu0
    %v388 = vadd.f32 0.0, %v387
    %v389 = vpop.f32.mrb[0].mxu0
    %v390 = vadd.f32 0.0, %v389
    %391 = vmatprep.mubr.f32.mxu0 0.0
    %392 = vmatmul.mubr.f32.gmra.mrb[0].mxu0 %v61
    %v393 = vpop.f32.mrb[0].mxu0
    %v394 = vadd.f32 0.0, %v393
    %v395 = vpop.f32.mrb[0].mxu0
    %v396 = vadd.f32 0.0, %v395
    %397 = vmatprep.mubr.f32.mxu0 0.0
    %398 = vmatmul.mubr.f32.gmra.mrb[0].mxu0 %v62
    %v399 = vpop.f32.mrb[0].mxu0
    %v400 = vadd.f32 0.0, %v399
    %v401 = vpop.f32.mrb[0].mxu0
    %v402 = vadd.f32 0.0, %v401
    %403 = vmatprep.mubr.f32.mxu0 0.0
    %404 = vmatmul.mubr.f32.gmra.mrb[0].mxu0 %v63
    %v405 = vpop.f32.mrb[0].mxu0
    %v406 = vadd.f32 0.0, %v405
    %v407 = vpop.f32.mrb[0].mxu0
    %v408 = vadd.f32 0.0, %v407
    %409 = vmatprep.mubr.f32.mxu0 0.0
    %410 = vmatmul.mubr.f32.gmra.mrb[0].mxu0 %v64
    %v411 = vpop.f32.mrb[0].mxu0
    %v412 = vadd.f32 0.0, %v411
    %v413 = vpop.f32.mrb[0].mxu0
    %v414 = vadd.f32 0.0, %v413
    %415 = vmatprep.mubr.f32.mxu0 0.0
    %416 = vmatmul.mubr.f32.gmra.mrb[0].mxu0 %v65
    %v417 = vpop.f32.mrb[0].mxu0
    %v418 = vadd.f32 0.0, %v417
    %v419 = vpop.f32.mrb[0].mxu0
    %v420 = vadd.f32 0.0, %v419
    %421 = vmatprep.mubr.f32.mxu0 0.0
    %422 = vmatmul.mubr.f32.gmra.mrb[0].mxu0 %v66
    %v423 = vpop.f32.mrb[0].mxu0
    %v424 = vadd.f32 0.0, %v423
    %v425 = vpop.f32.mrb[0].mxu0
    %v426 = vadd.f32 0.0, %v425
    %427 = vmatprep.mubr.f32.mxu0 0.0
    %428 = vmatmul.mubr.f32.gmra.mrb[0].mxu0 %v67
    %v429 = vpop.f32.mrb[0].mxu0
    %v430 = vadd.f32 0.0, %v429
    %v431 = vpop.f32.mrb[0].mxu0
    %v432 = vadd.f32 0.0, %v431
    %433 = vmatprep.mubr.f32.mxu0 0.0
    %434 = vmatmul.mubr.f32.gmra.mrb[0].mxu0 %v68
    %v435 = vpop.f32.mrb[0].mxu0
    %v436 = vadd.f32 0.0, %v435
    %v437 = vpop.f32.mrb[0].mxu0
    %v438 = vadd.f32 0.0, %v437
    %439 = vmatprep.mubr.f32.mxu0 0.0
    %440 = vmatmul.mubr.f32.gmra.mrb[0].mxu0 %v69
    %v441 = vpop.f32.mrb[0].mxu0
    %v442 = vadd.f32 0.0, %v441
    %v443 = vpop.f32.mrb[0].mxu0
    %v444 = vadd.f32 0.0, %v443
    %445 = vmatprep.mubr.f32.mxu0 0.0
    %446 = vmatmul.mubr.f32.gmra.mrb[0].mxu0 %v70
    %v447 = vpop.f32.mrb[0].mxu0
    %v448 = vadd.f32 0.0, %v447
    %v449 = vpop.f32.mrb[0].mxu0
    %v450 = vadd.f32 0.0, %v449
    %451 = vmatprep.mubr.f32.mxu0 0.0
    %452 = vmatmul.mubr.f32.gmra.mrb[0].mxu0 %v71
    %v453 = vpop.f32.mrb[0].mxu0
    %v454 = vadd.f32 0.0, %v453
    %v455 = vpop.f32.mrb[0].mxu0
    %v456 = vadd.f32 0.0, %v455
    %457 = vdwg.mxu0
    %v458 = vmax.f32 %v203, 0.0
    %v459 = vmax.f32 %v205, 0.0
    %v460 = vmax.f32 %v364, 0.0
    %v461 = vmax.f32 %v366, 0.0
    %v462 = vmax.f32 %v209, 0.0
    %v463 = vmax.f32 %v211, 0.0
    %v464 = vmax.f32 %v370, 0.0
    %v465 = vmax.f32 %v372, 0.0
    %v466 = vmax.f32 %v215, 0.0
    %v467 = vmax.f32 %v217, 0.0
    %v468 = vmax.f32 %v376, 0.0
    %v469 = vmax.f32 %v378, 0.0
    %v470 = vmax.f32 %v221, 0.0
    %v471 = vmax.f32 %v223, 0.0
    %v472 = vmax.f32 %v382, 0.0
    %v473 = vmax.f32 %v384, 0.0
    %v474 = vmax.f32 %v227, 0.0
    %v475 = vmax.f32 %v229, 0.0
    %v476 = vmax.f32 %v388, 0.0
    %v477 = vmax.f32 %v390, 0.0
    %v478 = vmax.f32 %v233, 0.0
    %v479 = vmax.f32 %v235, 0.0
    %v480 = vmax.f32 %v394, 0.0
    %v481 = vmax.f32 %v396, 0.0
    %v482 = vmax.f32 %v239, 0.0
    %v483 = vmax.f32 %v241, 0.0
    %v484 = vmax.f32 %v400, 0.0
    %v485 = vmax.f32 %v402, 0.0
    %v486 = vmax.f32 %v245, 0.0
    %v487 = vmax.f32 %v247, 0.0
    %v488 = vmax.f32 %v406, 0.0
    %v489 = vmax.f32 %v408, 0.0
    %v490 = vmax.f32 %v251, 0.0
    %v491 = vmax.f32 %v253, 0.0
    %v492 = vmax.f32 %v412, 0.0
    %v493 = vmax.f32 %v414, 0.0
    %v494 = vmax.f32 %v257, 0.0
    %v495 = vmax.f32 %v259, 0.0
    %v496 = vmax.f32 %v418, 0.0
    %v497 = vmax.f32 %v420, 0.0
    %v498 = vmax.f32 %v263, 0.0
    %v499 = vmax.f32 %v265, 0.0
    %v500 = vmax.f32 %v424, 0.0
    %v501 = vmax.f32 %v426, 0.0
    %v502 = vmax.f32 %v269, 0.0
    %v503 = vmax.f32 %v271, 0.0
    %v504 = vmax.f32 %v430, 0.0
    %v505 = vmax.f32 %v432, 0.0
    %v506 = vmax.f32 %v275, 0.0
    %v507 = vmax.f32 %v277, 0.0
    %v508 = vmax.f32 %v436, 0.0
    %v509 = vmax.f32 %v438, 0.0
    %v510 = vmax.f32 %v281, 0.0
    %v511 = vmax.f32 %v283, 0.0
    %v512 = vmax.f32 %v442, 0.0
    %v513 = vmax.f32 %v444, 0.0
    %v514 = vmax.f32 %v287, 0.0
    %v515 = vmax.f32 %v289, 0.0
    %v516 = vmax.f32 %v448, 0.0
    %v517 = vmax.f32 %v450, 0.0
    %v518 = vmax.f32 %v293, 0.0
    %v519 = vmax.f32 %v295, 0.0
    %v520 = vmax.f32 %v454, 0.0
    %v521 = vmax.f32 %v456, 0.0
    %v522 = vld [vmem:[#allocation7] sm:$0xff]
    %v523 = vld [vmem:[#allocation7 + $0x8] sm:$0xff]
    %v524 = vld [vmem:[#allocation7 + $0x10] sm:$0xff]
    %v525 = vld [vmem:[#allocation7 + $0x18] sm:$0xff]
    %v526 = vld [vmem:[#allocation7 + $0x20] sm:$0xff]
    %v527 = vld [vmem:[#allocation7 + $0x28] sm:$0xff]
    %v528 = vld [vmem:[#allocation7 + $0x30] sm:$0xff]
    %v529 = vld [vmem:[#allocation7 + $0x38] sm:$0xff]
    %v530 = vld [vmem:[#allocation7 + $0x40] sm:$0xff]
    %v531 = vld [vmem:[#allocation7 + $0x48] sm:$0xff]
    %v532 = vld [vmem:[#allocation7 + $0x50] sm:$0xff]
    %v533 = vld [vmem:[#allocation7 + $0x58] sm:$0xff]
    %v534 = vld [vmem:[#allocation7 + $0x60] sm:$0xff]
    %v535 = vld [vmem:[#allocation7 + $0x68] sm:$0xff]
    %v536 = vld [vmem:[#allocation7 + $0x70] sm:$0xff]
    %v537 = vld [vmem:[#allocation7 + $0x78] sm:$0xff]
    %v538 = vld [vmem:[#allocation7 + $0x80] sm:$0xff]
    %v539 = vld [vmem:[#allocation7 + $0x88] sm:$0xff]
    %v540 = vld [vmem:[#allocation7 + $0x90] sm:$0xff]
    %v541 = vld [vmem:[#allocation7 + $0x98] sm:$0xff]
    %v542 = vld [vmem:[#allocation7 + $0xa0] sm:$0xff]
    %v543 = vld [vmem:[#allocation7 + $0xa8] sm:$0xff]
    %v544 = vld [vmem:[#allocation7 + $0xb0] sm:$0xff]
    %v545 = vld [vmem:[#allocation7 + $0xb8] sm:$0xff]
    %v546 = vld [vmem:[#allocation7 + $0xc0] sm:$0xff]
    %v547 = vld [vmem:[#allocation7 + $0xc8] sm:$0xff]
    %v548 = vld [vmem:[#allocation7 + $0xd0] sm:$0xff]
    %v549 = vld [vmem:[#allocation7 + $0xd8] sm:$0xff]
    %v550 = vld [vmem:[#allocation7 + $0xe0] sm:$0xff]
    %v551 = vld [vmem:[#allocation7 + $0xe8] sm:$0xff]
    %v552 = vld [vmem:[#allocation7 + $0xf0] sm:$0xff]
    %v553 = vld [vmem:[#allocation7 + $0xf8] sm:$0xff]
    %v554 = vld [vmem:[#allocation7 + $0x100] sm:$0xff]
    %v555 = vld [vmem:[#allocation7 + $0x108] sm:$0xff]
    %v556 = vld [vmem:[#allocation7 + $0x110] sm:$0xff]
    %v557 = vld [vmem:[#allocation7 + $0x118] sm:$0xff]
    %v558 = vld [vmem:[#allocation7 + $0x120] sm:$0xff]
    %v559 = vld [vmem:[#allocation7 + $0x128] sm:$0xff]
    %v560 = vld [vmem:[#allocation7 + $0x130] sm:$0xff]
    %v561 = vld [vmem:[#allocation7 + $0x138] sm:$0xff]
    %v562 = vld [vmem:[#allocation7 + $0x140] sm:$0xff]
    %v563 = vld [vmem:[#allocation7 + $0x148] sm:$0xff]
    %v564 = vld [vmem:[#allocation7 + $0x150] sm:$0xff]
    %v565 = vld [vmem:[#allocation7 + $0x158] sm:$0xff]
    %v566 = vld [vmem:[#allocation7 + $0x160] sm:$0xff]
    %v567 = vld [vmem:[#allocation7 + $0x168] sm:$0xff]
    %v568 = vld [vmem:[#allocation7 + $0x170] sm:$0xff]
    %v569 = vld [vmem:[#allocation7 + $0x178] sm:$0xff]
    %v570 = vld [vmem:[#allocation7 + $0x180] sm:$0xff]
    %v571 = vld [vmem:[#allocation7 + $0x188] sm:$0xff]
    %v572 = vld [vmem:[#allocation7 + $0x190] sm:$0xff]
    %v573 = vld [vmem:[#allocation7 + $0x198] sm:$0xff]
    %v574 = vld [vmem:[#allocation7 + $0x1a0] sm:$0xff]
    %v575 = vld [vmem:[#allocation7 + $0x1a8] sm:$0xff]
    %v576 = vld [vmem:[#allocation7 + $0x1b0] sm:$0xff]
    %v577 = vld [vmem:[#allocation7 + $0x1b8] sm:$0xff]
    %v578 = vld [vmem:[#allocation7 + $0x1c0] sm:$0xff]
    %v579 = vld [vmem:[#allocation7 + $0x1c8] sm:$0xff]
    %v580 = vld [vmem:[#allocation7 + $0x1d0] sm:$0xff]
    %v581 = vld [vmem:[#allocation7 + $0x1d8] sm:$0xff]
    %v582 = vld [vmem:[#allocation7 + $0x1e0] sm:$0xff]
    %v583 = vld [vmem:[#allocation7 + $0x1e8] sm:$0xff]
    %v584 = vld [vmem:[#allocation7 + $0x1f0] sm:$0xff]
    %v585 = vld [vmem:[#allocation7 + $0x1f8] sm:$0xff]
    %586 = vmatprep.subr.mxu0 0.0
    %587 = vmatpush1.msra.mxu0 %v522
    %588 = vmatprep.subr.mxu0 0.0
    %589 = vmatpush1.msra.mxu0 %v523
    %590 = vmatprep.subr.mxu0 0.0
    %591 = vmatpush1.msra.mxu0 %v524
    %592 = vmatprep.subr.mxu0 0.0
    %593 = vmatpush1.msra.mxu0 %v525
    %594 = vmatprep.subr.mxu0 0.0
    %595 = vmatpush1.msra.mxu0 %v526
    %596 = vmatprep.subr.mxu0 0.0
    %597 = vmatpush1.msra.mxu0 %v527
    %598 = vmatprep.subr.mxu0 0.0
    %599 = vmatpush1.msra.mxu0 %v528
    %600 = vmatprep.subr.mxu0 0.0
    %601 = vmatpush1.msra.mxu0 %v529
    %602 = vmatprep.subr.mxu0 0.0
    %603 = vmatpush1.msra.mxu0 %v530
    %604 = vmatprep.subr.mxu0 0.0
    %605 = vmatpush1.msra.mxu0 %v531
    %606 = vmatprep.subr.mxu0 0.0
    %607 = vmatpush1.msra.mxu0 %v532
    %608 = vmatprep.subr.mxu0 0.0
    %609 = vmatpush1.msra.mxu0 %v533
    %610 = vmatprep.subr.mxu0 0.0
    %611 = vmatpush1.msra.mxu0 %v534
    %612 = vmatprep.subr.mxu0 0.0
    %613 = vmatpush1.msra.mxu0 %v535
    %614 = vmatprep.subr.mxu0 0.0
    %615 = vmatpush1.msra.mxu0 %v536
    %616 = vmatprep.subr.mxu0 0.0
    %617 = vmatpush1.msra.mxu0 %v537
    %618 = vmatprep.subr.mxu0 0.0
    %619 = vmatpush1.msra.mxu0 %v538
    %620 = vmatprep.subr.mxu0 0.0
    %621 = vmatpush1.msra.mxu0 %v539
    %622 = vmatprep.subr.mxu0 0.0
    %623 = vmatpush1.msra.mxu0 %v540
    %624 = vmatprep.subr.mxu0 0.0
    %625 = vmatpush1.msra.mxu0 %v541
    %626 = vmatprep.subr.mxu0 0.0
    %627 = vmatpush1.msra.mxu0 %v542
    %628 = vmatprep.subr.mxu0 0.0
    %629 = vmatpush1.msra.mxu0 %v543
    %630 = vmatprep.subr.mxu0 0.0
    %631 = vmatpush1.msra.mxu0 %v544
    %632 = vmatprep.subr.mxu0 0.0
    %633 = vmatpush1.msra.mxu0 %v545
    %634 = vmatprep.subr.mxu0 0.0
    %635 = vmatpush1.msra.mxu0 %v546
    %636 = vmatprep.subr.mxu0 0.0
    %637 = vmatpush1.msra.mxu0 %v547
    %638 = vmatprep.subr.mxu0 0.0
    %639 = vmatpush1.msra.mxu0 %v548
    %640 = vmatprep.subr.mxu0 0.0
    %641 = vmatpush1.msra.mxu0 %v549
    %642 = vmatprep.subr.mxu0 0.0
    %643 = vmatpush1.msra.mxu0 %v550
    %644 = vmatprep.subr.mxu0 0.0
    %645 = vmatpush1.msra.mxu0 %v551
    %646 = vmatprep.subr.mxu0 0.0
    %647 = vmatpush1.msra.mxu0 %v552
    %648 = vmatprep.subr.mxu0 0.0
    %649 = vmatpush1.msra.mxu0 %v553
    %650 = vmatprep.mubr.f32.mxu0 %v459
    %651 = vmatmul.mubr.f32.gmra.mrb[0].mxu0 %v458
    %v652 = vpop.f32.mrb[0].mxu0
    %v653 = vadd.f32 0.0, %v652
    %v654 = vpop.f32.mrb[0].mxu0
    %655 = vmatprep.mubr.f32.mxu0 %v463
    %656 = vmatmul.mubr.f32.gmra.mrb[0].mxu0 %v462
    %v657 = vpop.f32.mrb[0].mxu0
    %v658 = vadd.f32 0.0, %v657
    %v659 = vpop.f32.mrb[0].mxu0
    %660 = vmatprep.mubr.f32.mxu0 %v467
    %661 = vmatmul.mubr.f32.gmra.mrb[0].mxu0 %v466
    %v662 = vpop.f32.mrb[0].mxu0
    %v663 = vadd.f32 0.0, %v662
    %v664 = vpop.f32.mrb[0].mxu0
    %665 = vmatprep.mubr.f32.mxu0 %v471
    %666 = vmatmul.mubr.f32.gmra.mrb[0].mxu0 %v470
    %v667 = vpop.f32.mrb[0].mxu0
    %v668 = vadd.f32 0.0, %v667
    %v669 = vpop.f32.mrb[0].mxu0
    %670 = vmatprep.mubr.f32.mxu0 %v475
    %671 = vmatmul.mubr.f32.gmra.mrb[0].mxu0 %v474
    %v672 = vpop.f32.mrb[0].mxu0
    %v673 = vadd.f32 0.0, %v672
    %v674 = vpop.f32.mrb[0].mxu0
    %675 = vmatprep.mubr.f32.mxu0 %v479
    %676 = vmatmul.mubr.f32.gmra.mrb[0].mxu0 %v478
    %v677 = vpop.f32.mrb[0].mxu0
    %v678 = vadd.f32 0.0, %v677
    %v679 = vpop.f32.mrb[0].mxu0
    %680 = vmatprep.mubr.f32.mxu0 %v483
    %681 = vmatmul.mubr.f32.gmra.mrb[0].mxu0 %v482
    %v682 = vpop.f32.mrb[0].mxu0
    %v683 = vadd.f32 0.0, %v682
    %v684 = vpop.f32.mrb[0].mxu0
    %685 = vmatprep.mubr.f32.mxu0 %v487
    %686 = vmatmul.mubr.f32.gmra.mrb[0].mxu0 %v486
    %v687 = vpop.f32.mrb[0].mxu0
    %v688 = vadd.f32 0.0, %v687
    %v689 = vpop.f32.mrb[0].mxu0
    %690 = vmatprep.mubr.f32.mxu0 %v491
    %691 = vmatmul.mubr.f32.gmra.mrb[0].mxu0 %v490
    %v692 = vpop.f32.mrb[0].mxu0
    %v693 = vadd.f32 0.0, %v692
    %v694 = vpop.f32.mrb[0].mxu0
    %695 = vmatprep.mubr.f32.mxu0 %v495
    %696 = vmatmul.mubr.f32.gmra.mrb[0].mxu0 %v494
    %v697 = vpop.f32.mrb[0].mxu0
    %v698 = vadd.f32 0.0, %v697
    %v699 = vpop.f32.mrb[0].mxu0
    %700 = vmatprep.mubr.f32.mxu0 %v499
    %701 = vmatmul.mubr.f32.gmra.mrb[0].mxu0 %v498
    %v702 = vpop.f32.mrb[0].mxu0
    %v703 = vadd.f32 0.0, %v702
    %v704 = vpop.f32.mrb[0].mxu0
    %705 = vmatprep.mubr.f32.mxu0 %v503
    %706 = vmatmul.mubr.f32.gmra.mrb[0].mxu0 %v502
    %v707 = vpop.f32.mrb[0].mxu0
    %v708 = vadd.f32 0.0, %v707
    %v709 = vpop.f32.mrb[0].mxu0
    %710 = vmatprep.mubr.f32.mxu0 %v507
    %711 = vmatmul.mubr.f32.gmra.mrb[0].mxu0 %v506
    %v712 = vpop.f32.mrb[0].mxu0
    %v713 = vadd.f32 0.0, %v712
    %v714 = vpop.f32.mrb[0].mxu0
    %715 = vmatprep.mubr.f32.mxu0 %v511
    %716 = vmatmul.mubr.f32.gmra.mrb[0].mxu0 %v510
    %v717 = vpop.f32.mrb[0].mxu0
    %v718 = vadd.f32 0.0, %v717
    %v719 = vpop.f32.mrb[0].mxu0
    %720 = vmatprep.mubr.f32.mxu0 %v515
    %721 = vmatmul.mubr.f32.gmra.mrb[0].mxu0 %v514
    %v722 = vpop.f32.mrb[0].mxu0
    %v723 = vadd.f32 0.0, %v722
    %v724 = vpop.f32.mrb[0].mxu0
    %725 = vmatprep.mubr.f32.mxu0 %v519
    %726 = vmatmul.mubr.f32.gmra.mrb[0].mxu0 %v518
    %v727 = vpop.f32.mrb[0].mxu0
    %v728 = vadd.f32 0.0, %v727
    %v729 = vpop.f32.mrb[0].mxu0
    %730 = vdwg.mxu0
    %731 = vmatprep.subr.mxu0 0.0
    %732 = vmatpush1.msra.mxu0 %v554
    %733 = vmatprep.subr.mxu0 0.0
    %734 = vmatpush1.msra.mxu0 %v555
    %735 = vmatprep.subr.mxu0 0.0
    %736 = vmatpush1.msra.mxu0 %v556
    %737 = vmatprep.subr.mxu0 0.0
    %738 = vmatpush1.msra.mxu0 %v557
    %739 = vmatprep.subr.mxu0 0.0
    %740 = vmatpush1.msra.mxu0 %v558
    %741 = vmatprep.subr.mxu0 0.0
    %742 = vmatpush1.msra.mxu0 %v559
    %743 = vmatprep.subr.mxu0 0.0
    %744 = vmatpush1.msra.mxu0 %v560
    %745 = vmatprep.subr.mxu0 0.0
    %746 = vmatpush1.msra.mxu0 %v561
    %747 = vmatprep.subr.mxu0 0.0
    %748 = vmatpush1.msra.mxu0 %v562
    %749 = vmatprep.subr.mxu0 0.0
    %750 = vmatpush1.msra.mxu0 %v563
    %751 = vmatprep.subr.mxu0 0.0
    %752 = vmatpush1.msra.mxu0 %v564
    %753 = vmatprep.subr.mxu0 0.0
    %754 = vmatpush1.msra.mxu0 %v565
    %755 = vmatprep.subr.mxu0 0.0
    %756 = vmatpush1.msra.mxu0 %v566
    %757 = vmatprep.subr.mxu0 0.0
    %758 = vmatpush1.msra.mxu0 %v567
    %759 = vmatprep.subr.mxu0 0.0
    %760 = vmatpush1.msra.mxu0 %v568
    %761 = vmatprep.subr.mxu0 0.0
    %762 = vmatpush1.msra.mxu0 %v569
    %763 = vmatprep.subr.mxu0 0.0
    %764 = vmatpush1.msra.mxu0 %v570
    %765 = vmatprep.subr.mxu0 0.0
    %766 = vmatpush1.msra.mxu0 %v571
    %767 = vmatprep.subr.mxu0 0.0
    %768 = vmatpush1.msra.mxu0 %v572
    %769 = vmatprep.subr.mxu0 0.0
    %770 = vmatpush1.msra.mxu0 %v573
    %771 = vmatprep.subr.mxu0 0.0
    %772 = vmatpush1.msra.mxu0 %v574
    %773 = vmatprep.subr.mxu0 0.0
    %774 = vmatpush1.msra.mxu0 %v575
    %775 = vmatprep.subr.mxu0 0.0
    %776 = vmatpush1.msra.mxu0 %v576
    %777 = vmatprep.subr.mxu0 0.0
    %778 = vmatpush1.msra.mxu0 %v577
    %779 = vmatprep.subr.mxu0 0.0
    %780 = vmatpush1.msra.mxu0 %v578
    %781 = vmatprep.subr.mxu0 0.0
    %782 = vmatpush1.msra.mxu0 %v579
    %783 = vmatprep.subr.mxu0 0.0
    %784 = vmatpush1.msra.mxu0 %v580
    %785 = vmatprep.subr.mxu0 0.0
    %786 = vmatpush1.msra.mxu0 %v581
    %787 = vmatprep.subr.mxu0 0.0
    %788 = vmatpush1.msra.mxu0 %v582
    %789 = vmatprep.subr.mxu0 0.0
    %790 = vmatpush1.msra.mxu0 %v583
    %791 = vmatprep.subr.mxu0 0.0
    %792 = vmatpush1.msra.mxu0 %v584
    %793 = vmatprep.subr.mxu0 0.0
    %794 = vmatpush1.msra.mxu0 %v585
    %795 = vmatprep.mubr.f32.mxu0 %v461
    %796 = vmatmul.mubr.f32.gmra.mrb[0].mxu0 %v460
    %v797 = vpop.f32.mrb[0].mxu0
    %v798 = vadd.f32 %v653, %v797
    %v799 = vpop.f32.mrb[0].mxu0
    %800 = vmatprep.mubr.f32.mxu0 %v465
    %801 = vmatmul.mubr.f32.gmra.mrb[0].mxu0 %v464
    %v802 = vpop.f32.mrb[0].mxu0
    %v803 = vadd.f32 %v658, %v802
    %v804 = vpop.f32.mrb[0].mxu0
    %805 = vmatprep.mubr.f32.mxu0 %v469
    %806 = vmatmul.mubr.f32.gmra.mrb[0].mxu0 %v468
    %v807 = vpop.f32.mrb[0].mxu0
    %v808 = vadd.f32 %v663, %v807
    %v809 = vpop.f32.mrb[0].mxu0
    %810 = vmatprep.mubr.f32.mxu0 %v473
    %811 = vmatmul.mubr.f32.gmra.mrb[0].mxu0 %v472
    %v812 = vpop.f32.mrb[0].mxu0
    %v813 = vadd.f32 %v668, %v812
    %v814 = vpop.f32.mrb[0].mxu0
    %815 = vmatprep.mubr.f32.mxu0 %v477
    %816 = vmatmul.mubr.f32.gmra.mrb[0].mxu0 %v476
    %v817 = vpop.f32.mrb[0].mxu0
    %v818 = vadd.f32 %v673, %v817
    %v819 = vpop.f32.mrb[0].mxu0
    %820 = vmatprep.mubr.f32.mxu0 %v481
    %821 = vmatmul.mubr.f32.gmra.mrb[0].mxu0 %v480
    %v822 = vpop.f32.mrb[0].mxu0
    %v823 = vadd.f32 %v678, %v822
    %v824 = vpop.f32.mrb[0].mxu0
    %825 = vmatprep.mubr.f32.mxu0 %v485
    %826 = vmatmul.mubr.f32.gmra.mrb[0].mxu0 %v484
    %v827 = vpop.f32.mrb[0].mxu0
    %v828 = vadd.f32 %v683, %v827
    %v829 = vpop.f32.mrb[0].mxu0
    %830 = vmatprep.mubr.f32.mxu0 %v489
    %831 = vmatmul.mubr.f32.gmra.mrb[0].mxu0 %v488
    %v832 = vpop.f32.mrb[0].mxu0
    %v833 = vadd.f32 %v688, %v832
    %v834 = vpop.f32.mrb[0].mxu0
    %835 = vmatprep.mubr.f32.mxu0 %v493
    %836 = vmatmul.mubr.f32.gmra.mrb[0].mxu0 %v492
    %v837 = vpop.f32.mrb[0].mxu0
    %v838 = vadd.f32 %v693, %v837
    %v839 = vpop.f32.mrb[0].mxu0
    %840 = vmatprep.mubr.f32.mxu0 %v497
    %841 = vmatmul.mubr.f32.gmra.mrb[0].mxu0 %v496
    %v842 = vpop.f32.mrb[0].mxu0
    %v843 = vadd.f32 %v698, %v842
    %v844 = vpop.f32.mrb[0].mxu0
    %845 = vmatprep.mubr.f32.mxu0 %v501
    %846 = vmatmul.mubr.f32.gmra.mrb[0].mxu0 %v500
    %v847 = vpop.f32.mrb[0].mxu0
    %v848 = vadd.f32 %v703, %v847
    %v849 = vpop.f32.mrb[0].mxu0
    %850 = vmatprep.mubr.f32.mxu0 %v505
    %851 = vmatmul.mubr.f32.gmra.mrb[0].mxu0 %v504
    %v852 = vpop.f32.mrb[0].mxu0
    %v853 = vadd.f32 %v708, %v852
    %v854 = vpop.f32.mrb[0].mxu0
    %855 = vmatprep.mubr.f32.mxu0 %v509
    %856 = vmatmul.mubr.f32.gmra.mrb[0].mxu0 %v508
    %v857 = vpop.f32.mrb[0].mxu0
    %v858 = vadd.f32 %v713, %v857
    %v859 = vpop.f32.mrb[0].mxu0
    %860 = vmatprep.mubr.f32.mxu0 %v513
    %861 = vmatmul.mubr.f32.gmra.mrb[0].mxu0 %v512
    %v862 = vpop.f32.mrb[0].mxu0
    %v863 = vadd.f32 %v718, %v862
    %v864 = vpop.f32.mrb[0].mxu0
    %865 = vmatprep.mubr.f32.mxu0 %v517
    %866 = vmatmul.mubr.f32.gmra.mrb[0].mxu0 %v516
    %v867 = vpop.f32.mrb[0].mxu0
    %v868 = vadd.f32 %v723, %v867
    %v869 = vpop.f32.mrb[0].mxu0
    %870 = vmatprep.mubr.f32.mxu0 %v521
    %871 = vmatmul.mubr.f32.gmra.mrb[0].mxu0 %v520
    %v872 = vpop.f32.mrb[0].mxu0
    %v873 = vadd.f32 %v728, %v872
    %v874 = vpop.f32.mrb[0].mxu0
    %875 = vdwg.mxu0
    %876 = vst [vmem:[#allocation8] sm:$0xff] %v798
    %877 = vst [vmem:[#allocation8 + $0x8] sm:$0xff] %v803
    %878 = vst [vmem:[#allocation8 + $0x10] sm:$0xff] %v808
    %879 = vst [vmem:[#allocation8 + $0x18] sm:$0xff] %v813
    %880 = vst [vmem:[#allocation8 + $0x20] sm:$0xff] %v818
    %881 = vst [vmem:[#allocation8 + $0x28] sm:$0xff] %v823
    %882 = vst [vmem:[#allocation8 + $0x30] sm:$0xff] %v828
    %883 = vst [vmem:[#allocation8 + $0x38] sm:$0xff] %v833
    %884 = vst [vmem:[#allocation8 + $0x40] sm:$0xff] %v838
    %885 = vst [vmem:[#allocation8 + $0x48] sm:$0xff] %v843
    %886 = vst [vmem:[#allocation8 + $0x50] sm:$0xff] %v848
    %887 = vst [vmem:[#allocation8 + $0x58] sm:$0xff] %v853
    %888 = vst [vmem:[#allocation8 + $0x60] sm:$0xff] %v858
    %889 = vst [vmem:[#allocation8 + $0x68] sm:$0xff] %v863
    %890 = vst [vmem:[#allocation8 + $0x70] sm:$0xff] %v868
    %891 = vst [vmem:[#allocation8 + $0x78] sm:$0xff] %v873
    // Predicated region
    $region26: #{tpu_custom_call.1} parent=1 // pred_check
      _
    $region27: #{tpu_custom_call.1} parent=1 // pred_check_branch
      %893 = sbr.rel (0) target = $region29
    $region28: #{tpu_custom_call.1} parent=1 // pred_region
      %s895 = ssub.s32 2048, 2048
      %896 = vsyncadd [#allocation4], %s895
      %s897 = sshll.u32 [#allocation8], 4
      %s898 = int_to_ptr.vmem [resolvable:$true] %s897
      %903 = dma.vmem_to_hbm [thread:$0]  %s898, 2048, %s3, [#allocation4], 128, 128, 8
    $region29: #{tpu_custom_call.1} parent=1 // pred_fallthru
      _
    // Predicated region
    $region30: #{tpu_custom_call.1} parent=1 // pred_check
      _
    $region31: #{tpu_custom_call.1} parent=1 // pred_check_branch
      %905 = sbr.rel (0) target = $region33
    $region32: #{tpu_custom_call.1} parent=1 // pred_region
      %906 = dma.done [#allocation4], 2048
    $region33: #{tpu_custom_call.1} parent=1 // pred_fallthru
      _
    %907 = vsyncpa [#allocation3], 1
    %908 = vsyncpa [#allocation6], 1
    %909 = vsyncpa [#allocation4], 1

</llo_original>
